<compile_context>
chip_gen: v6e
topology: v6e:2x2x1
jax: 0.10.0
libtpu: 0.0.40
codegen_flags: <defaults>
</compile_context>

<pallas_src>
import functools

import jax
import jax.numpy as jnp
from jax.experimental import pallas as pl
from jax.experimental.pallas import tpu as pltpu

INPUT_SIZE = 27
K_PAD = 32            # fc1 contraction dim padded 27 -> 32
HIDDEN = 256
OUTPUT_SIZE = 9


def policy_kernel(x_ref, w1_ref, b1_ref, w2_ref, b2_ref, o_ref):
    # fc1: bf16 MXU matmul, f32 accumulate; bias + ReLU in f32.
    h = jnp.dot(x_ref[...], w1_ref[...], preferred_element_type=jnp.float32)
    h = jnp.maximum(h + b1_ref[...], 0.0)
    # fc2: bf16 MXU matmul, f32 accumulate; bias in f32.
    logits = jnp.dot(h.astype(jnp.bfloat16), w2_ref[...],
                     preferred_element_type=jnp.float32)
    logits = logits + b2_ref[...]
    # Numerically stable softmax over the last dim (nn.Softmax on 2D -> dim=1).
    m = jnp.max(logits, axis=-1, keepdims=True)
    e = jnp.exp(logits - m)
    denom = jnp.sum(e, axis=-1, keepdims=True)
    o_ref[...] = e * pl.reciprocal(denom, approx=True)


def _round_up(x, m):
    return (x + m - 1) // m * m


@functools.partial(jax.jit, static_argnames=("block_b",))
def policy_forward(x, w1, b1, w2, b2, *, block_b=512):
    """softmax(relu(x @ w1 + b1) @ w2 + b2); w1/w2 stored transposed vs PyTorch."""
    B = x.shape[0]
    # Batch tile: multiple of 8 sublanes, capped at block_b (VMEM-safe on v7x).
    tb = min(block_b, _round_up(B, 8))
    b_pad = _round_up(B, tb)

    # One-time wrapper-side padding / casts (zeros are inert for the matmuls).
    x_pad = jnp.zeros((b_pad, K_PAD), jnp.bfloat16).at[:B, :INPUT_SIZE].set(
        x.astype(jnp.bfloat16))
    w1_p = jnp.zeros((K_PAD, HIDDEN), jnp.bfloat16).at[:INPUT_SIZE, :].set(
        w1.astype(jnp.bfloat16))
    w2_b = w2.astype(jnp.bfloat16)

    cost = pl.CostEstimate(
        flops=2 * b_pad * K_PAD * HIDDEN + 2 * b_pad * HIDDEN * OUTPUT_SIZE,
        transcendentals=b_pad * OUTPUT_SIZE,
        bytes_accessed=(b_pad * K_PAD * 2            # x (bf16)
                        + K_PAD * HIDDEN * 2         # w1 (bf16)
                        + HIDDEN * 4                 # b1 (f32)
                        + HIDDEN * OUTPUT_SIZE * 2   # w2 (bf16)
                        + OUTPUT_SIZE * 4            # b2 (f32)
                        + b_pad * OUTPUT_SIZE * 4),  # out (f32)
    )

    out = pl.pallas_call(
        policy_kernel,
        out_shape=jax.ShapeDtypeStruct((b_pad, OUTPUT_SIZE), jnp.float32),
        grid=(b_pad // tb,),
        in_specs=[
            pl.BlockSpec((tb, K_PAD), lambda i: (i, 0)),         # x tile (pipelined)
            pl.BlockSpec((K_PAD, HIDDEN), lambda i: (0, 0)),     # w1 (resident)
            pl.BlockSpec((1, HIDDEN), lambda i: (0, 0)),         # b1 (resident)
            pl.BlockSpec((HIDDEN, OUTPUT_SIZE), lambda i: (0, 0)),  # w2 (resident)
            pl.BlockSpec((1, OUTPUT_SIZE), lambda i: (0, 0)),    # b2 (resident)
        ],
        out_specs=pl.BlockSpec((tb, OUTPUT_SIZE), lambda i: (i, 0)),
        compiler_params=pltpu.CompilerParams(
            dimension_semantics=("parallel",)),                  # megacore on v7x
        cost_estimate=cost,
    )(x_pad, w1_p, b1, w2_b, b2)
    return out[:B]


def init_params(key, input_size=INPUT_SIZE, hidden_size=HIDDEN,
                output_size=OUTPUT_SIZE):
    # Deterministic init mimicking PyTorch Linear default:
    # U(-1/sqrt(fan_in), +1/sqrt(fan_in)).
    k1, k2, k3, k4 = jax.random.split(key, 4)
    bound1 = 1.0 / (input_size ** 0.5)
    bound2 = 1.0 / (hidden_size ** 0.5)
    w1 = jax.random.uniform(k1, (input_size, hidden_size), jnp.float32, -bound1, bound1)
    b1 = jax.random.uniform(k2, (1, hidden_size), jnp.float32, -bound1, bound1)
    w2 = jax.random.uniform(k3, (hidden_size, output_size), jnp.float32, -bound2, bound2)
    b2 = jax.random.uniform(k4, (1, output_size), jnp.float32, -bound2, bound2)
    return w1, b1, w2, b2


if __name__ == "__main__":
    key = jax.random.PRNGKey(0)
    kx, kp = jax.random.split(key)

    batch = 8
    x = jax.random.normal(kx, (batch, INPUT_SIZE), jnp.float32)
    w1, b1, w2, b2 = init_params(kp)

    out = jax.block_until_ready(policy_forward(x, w1, b1, w2, b2))

    # Reference check in plain JAX (f32 exact math).
    h_ref = jnp.maximum(x @ w1 + b1, 0.0)
    ref = jax.nn.softmax(h_ref @ w2 + b2, axis=-1)

    assert out.shape == (batch, OUTPUT_SIZE)
    # bf16 MXU inputs + approx reciprocal -> tolerance loosened vs f32 reference.
    assert jnp.allclose(out, ref, atol=2e-2, rtol=2e-2), float(jnp.max(jnp.abs(out - ref)))
    assert jnp.allclose(jnp.sum(out, axis=-1), 1.0, atol=2e-2)

    print("KERNEL_OK")
</pallas_src>

<mosaic_0001>
module attributes {stable_mosaic.version = 11 : i64} {
  func.func @policy_kernel(%arg0: i32, %arg1: memref<8x32xbf16, #tpu.memory_space<vmem>>, %arg2: memref<32x256xbf16, #tpu.memory_space<vmem>>, %arg3: memref<1x256xf32, #tpu.memory_space<vmem>>, %arg4: memref<256x9xbf16, #tpu.memory_space<vmem>>, %arg5: memref<1x9xf32, #tpu.memory_space<vmem>>, %arg6: memref<8x9xf32, #tpu.memory_space<vmem>>) attributes {dimension_semantics = [#tpu.dimension_semantics<parallel>], iteration_bounds = array<i64: 1>, scalar_prefetch = 0 : i64, scratch_operands = 0 : i64, tpu.core_type = #tpu.core_type<tc>, window_params = [{transform_indices = @transform_0, window_bounds = array<i64: 8, 32>}, {pipeline_mode = #tpu.pipeline_mode<synchronous>, transform_indices = @transform_1, window_bounds = array<i64: 32, 256>}, {pipeline_mode = #tpu.pipeline_mode<synchronous>, transform_indices = @transform_2, window_bounds = array<i64: 1, 256>}, {pipeline_mode = #tpu.pipeline_mode<synchronous>, transform_indices = @transform_3, window_bounds = array<i64: 256, 9>}, {pipeline_mode = #tpu.pipeline_mode<synchronous>, transform_indices = @transform_4, window_bounds = array<i64: 1, 9>}, {transform_indices = @transform_5, window_bounds = array<i64: 8, 9>}]} {
    %c0 = arith.constant 0 : index
    %c0_0 = arith.constant 0 : index
    %0 = vector.load %arg1[%c0, %c0_0] : memref<8x32xbf16, #tpu.memory_space<vmem>>, vector<8x32xbf16>
    %c0_1 = arith.constant 0 : index
    %c0_2 = arith.constant 0 : index
    %1 = vector.load %arg2[%c0_1, %c0_2] : memref<32x256xbf16, #tpu.memory_space<vmem>>, vector<32x256xbf16>
    %cst = arith.constant dense<0.000000e+00> : vector<8x256xf32>
    %2 = tpu.matmul %0, %1, %cst {dimension_numbers = #tpu.dot_dimension_numbers<[1], [0], [0], [1], [0, 0, 1, 1], [], []>} : vector<8x32xbf16>, vector<32x256xbf16>, vector<8x256xf32> -> vector<8x256xf32>
    %c0_3 = arith.constant 0 : index
    %c0_4 = arith.constant 0 : index
    %3 = vector.load %arg3[%c0_3, %c0_4] : memref<1x256xf32, #tpu.memory_space<vmem>>, vector<1x256xf32>
    %4 = vector.broadcast %3 : vector<1x256xf32> to vector<8x256xf32>
    %5 = arith.addf %2, %4 : vector<8x256xf32>
    %cst_5 = arith.constant 0.000000e+00 : f32
    %6 = vector.broadcast %cst_5 : f32 to vector<8x256xf32>
    %7 = arith.maximumf %5, %6 : vector<8x256xf32>
    %8 = arith.truncf %7 : vector<8x256xf32> to vector<8x256xbf16>
    %c0_6 = arith.constant 0 : index
    %c0_7 = arith.constant 0 : index
    %9 = vector.load %arg4[%c0_6, %c0_7] : memref<256x9xbf16, #tpu.memory_space<vmem>>, vector<256x9xbf16>
    %cst_8 = arith.constant dense<0.000000e+00> : vector<8x9xf32>
    %10 = tpu.matmul %8, %9, %cst_8 {dimension_numbers = #tpu.dot_dimension_numbers<[1], [0], [0], [1], [0, 0, 1, 1], [], []>} : vector<8x256xbf16>, vector<256x9xbf16>, vector<8x9xf32> -> vector<8x9xf32>
    %c0_9 = arith.constant 0 : index
    %c0_10 = arith.constant 0 : index
    %11 = vector.load %arg5[%c0_9, %c0_10] : memref<1x9xf32, #tpu.memory_space<vmem>>, vector<1x9xf32>
    %12 = vector.broadcast %11 : vector<1x9xf32> to vector<8x9xf32>
    %13 = arith.addf %10, %12 : vector<8x9xf32>
    %cst_11 = arith.constant dense<0xFF800000> : vector<8xf32>
    %14 = vector.multi_reduction <maximumf>, %13, %cst_11 [1] : vector<8x9xf32> to vector<8xf32>
    %15 = vector.shape_cast %14 : vector<8xf32> to vector<8x1xf32>
    %16 = vector.broadcast %15 : vector<8x1xf32> to vector<8x9xf32>
    %17 = arith.subf %13, %16 : vector<8x9xf32>
    %18 = math.exp %17 : vector<8x9xf32>
    %cst_12 = arith.constant dense<0.000000e+00> : vector<8xf32>
    %19 = vector.multi_reduction <add>, %18, %cst_12 [1] : vector<8x9xf32> to vector<8xf32>
    %20 = vector.shape_cast %19 : vector<8xf32> to vector<8x1xf32>
    %21 = tpu.reciprocal %20 {approx = true} : vector<8x1xf32> -> vector<8x1xf32>
    %22 = vector.broadcast %21 : vector<8x1xf32> to vector<8x9xf32>
    %23 = arith.mulf %18, %22 : vector<8x9xf32>
    %c0_13 = arith.constant 0 : index
    %c0_14 = arith.constant 0 : index
    %24 = vector.load %arg6[%c0_13, %c0_14] : memref<8x9xf32, #tpu.memory_space<vmem>>, vector<8x9xf32>
    tpu.vector_store %arg6[%c0_13, %c0_14], %23 {strides = array<i32>} : memref<8x9xf32, #tpu.memory_space<vmem>>, vector<8x9xf32>,
    return
  }
  func.func @transform_0(%arg0: i32) -> (i32, i32) {
    %c0_i32 = arith.constant 0 : i32
    %c0_i32_0 = arith.constant 0 : i32
    return %arg0, %c0_i32 : i32, i32
  }
  func.func @transform_1(%arg0: i32) -> (i32, i32) {
    %c0_i32 = arith.constant 0 : i32
    %c0_i32_0 = arith.constant 0 : i32
    %c0_i32_1 = arith.constant 0 : i32
    return %c0_i32, %c0_i32_0 : i32, i32
  }
  func.func @transform_2(%arg0: i32) -> (i32, i32) {
    %c0_i32 = arith.constant 0 : i32
    %c0_i32_0 = arith.constant 0 : i32
    %c0_i32_1 = arith.constant 0 : i32
    return %c0_i32, %c0_i32_0 : i32, i32
  }
  func.func @transform_3(%arg0: i32) -> (i32, i32) {
    %c0_i32 = arith.constant 0 : i32
    %c0_i32_0 = arith.constant 0 : i32
    %c0_i32_1 = arith.constant 0 : i32
    return %c0_i32, %c0_i32_0 : i32, i32
  }
  func.func @transform_4(%arg0: i32) -> (i32, i32) {
    %c0_i32 = arith.constant 0 : i32
    %c0_i32_0 = arith.constant 0 : i32
    %c0_i32_1 = arith.constant 0 : i32
    return %c0_i32, %c0_i32_0 : i32, i32
  }
  func.func @transform_5(%arg0: i32) -> (i32, i32) {
    %c0_i32 = arith.constant 0 : i32
    %c0_i32_0 = arith.constant 0 : i32
    return %arg0, %c0_i32 : i32, i32
  }
}

</mosaic_0001>

<llo_original>
// kernel: policy_forward.1
$region0: #{policy_forward.1}
  #allocation0 [shape = 'u32[]', space=smem, size = 0x4, offset = 0x4, fixed_abs, tag = 'smem constant byte address 0x4 - core index']
  #allocation1 [shape = 'u32[144,128]{1,0:T(1,128)}', space=vmem, size = 0x12000, scoped, tag = 'internal scratch']
  %s0 = inlined_call_operand.vmem [shape: bf16[8,32], index: 0, kind: input, shape index: {}]
  %s1 = inlined_call_operand.vmem [shape: bf16[32,256], index: 1, kind: input, shape index: {}]
  %s2 = inlined_call_operand.vmem [shape: f32[1,256], index: 2, kind: input, shape index: {}]
  %s3 = inlined_call_operand.vmem [shape: bf16[256,9], index: 3, kind: input, shape index: {}]
  %s4 = inlined_call_operand.vmem [shape: f32[1,9], index: 4, kind: input, shape index: {}]
  %s5 = inlined_call_operand.hbm [shape: f32[8,9], index: 5, kind: output, shape index: {}]
  %s6 = sld [smem:[#allocation0]]
  $region30: #{policy_forward.1} parent=0
    _
  %s8 = ssub.s32 1, %s6
  %s9 = scalar_select 0, %s8, %s6
  $region1: #{policy_forward.1} parent=0
    #allocation2 [shape = 'u8[4096]{0}', space=vmem, size = 0x1000, scoped, tag = 'output window, operand 0, single buffered']
    #allocation3 [shape = 's32[1]{0}', space=sflag, size = 0x4, scoped, tag = 'scoped memory for policy_forward.1']
    %10 = vsyncpa [#allocation3], 0
    // Predicated region
    $region2: #{policy_forward.1} parent=1 // pred_check
      _
    $region3: #{policy_forward.1} parent=1 // pred_check_branch
      %12 = sbr.rel (0) target = $region5
    $region4: #{policy_forward.1} parent=1 // pred_region
      _
    $region5: #{policy_forward.1} parent=1 // pred_fallthru
      _
    // Predicated region
    $region6: #{policy_forward.1} parent=1 // pred_check
      _
    $region7: #{policy_forward.1} parent=1 // pred_check_branch
      %14 = sbr.rel (0) target = $region9
    $region8: #{policy_forward.1} parent=1 // pred_region
      _
    $region9: #{policy_forward.1} parent=1 // pred_fallthru
      _
    // Predicated region
    $region10: #{policy_forward.1} parent=1 // pred_check
      _
    $region11: #{policy_forward.1} parent=1 // pred_check_branch
      %16 = sbr.rel (0) target = $region13
    $region12: #{policy_forward.1} parent=1 // pred_region
      _
    $region13: #{policy_forward.1} parent=1 // pred_fallthru
      _
    // Predicated region
    $region14: #{policy_forward.1} parent=1 // pred_check
      _
    $region15: #{policy_forward.1} parent=1 // pred_check_branch
      %18 = sbr.rel (0) target = $region17
    $region16: #{policy_forward.1} parent=1 // pred_region
      _
    $region17: #{policy_forward.1} parent=1 // pred_fallthru
      _
    // Predicated region
    $region18: #{policy_forward.1} parent=1 // pred_check
      _
    $region19: #{policy_forward.1} parent=1 // pred_check_branch
      %20 = sbr.rel (0) target = $region21
    $region20: #{policy_forward.1} parent=1 // pred_region
      _
    $region21: #{policy_forward.1} parent=1 // pred_fallthru
      _
    %v22 = vld [vmem:[%s0] sm:$0xf]
    %v23 = vld [vmem:[%s1] sm:$0xff]
    %v24 = vld [vmem:[%s1 + $0x8] sm:$0xff]
    %v25 = vld [vmem:[%s1 + $0x10] sm:$0xff]
    %v26 = vld [vmem:[%s1 + $0x18] sm:$0xff]
    %v27 = vld [vmem:[%s2] sm:$0x3]
    %v29 = vlaneseq
    %v30 = vshrl.u32 %v29, 7
    %v31 = vsub.s32 0, %v30
    %v32 = vrot.slane %v27, %v31
    %v33 = vlaneseq
    %v34 = vshrl.u32 %v33, 7
    %v35 = vsub.s32 1, %v34
    %v36 = vrot.slane %v27, %v35
    %v43 = vunpack.c.l.b16 %v23
    %v44 = vunpack.c.h.b16 %v23
    %v45 = vunpack.c.l.b16 %v24
    %v46 = vunpack.c.h.b16 %v24
    %v47 = vunpack.c.l.b16 %v25
    %v48 = vunpack.c.h.b16 %v25
    %v49 = vunpack.c.l.b16 %v26
    %v50 = vunpack.c.h.b16 %v26
    %v51 = vpack.c.b16 %v45, %v43
    %v52 = vpack.c.b16 %v46, %v44
    %v53 = vpack.c.b16 %v49, %v47
    %v54 = vpack.c.b16 %v50, %v48
    %vm59 = vcmask 261120
    %v61 = vsel %vm59, %v22, 0
    %63 = vmatprep.subr.bf16.mxu0 0
    %64 = vmatpush1.bf16.msra.mxu0 0
    %65 = vmatprep.subr.bf16.mxu0 0
    %66 = vmatpush1.bf16.msra.mxu0 0
    %67 = vmatprep.subr.bf16.mxu0 0
    %68 = vmatpush1.bf16.msra.mxu0 0
    %69 = vmatprep.subr.bf16.mxu0 0
    %70 = vmatpush1.bf16.msra.mxu0 0
    %71 = vmatprep.subr.bf16.mxu0 0
    %72 = vmatpush1.bf16.msra.mxu0 0
    %73 = vmatprep.subr.bf16.mxu0 0
    %74 = vmatpush1.bf16.msra.mxu0 0
    %75 = vmatprep.subr.bf16.mxu0 %v54
    %76 = vmatpush1.bf16.msra.mxu0 %v53
    %77 = vmatprep.subr.bf16.mxu0 %v52
    %78 = vmatpush1.bf16.msra.mxu0 %v51
    %79 = vmatprep.subr.bf16.mxu0 0
    %80 = vmatpush2.bf16.msra.mxu0 0
    %81 = vmatprep.subr.bf16.mxu0 0
    %82 = vmatpush2.bf16.msra.mxu0 0
    %83 = vmatprep.subr.bf16.mxu0 0
    %84 = vmatpush2.bf16.msra.mxu0 0
    %85 = vmatprep.subr.bf16.mxu0 0
    %86 = vmatpush2.bf16.msra.mxu0 0
    %87 = vmatprep.subr.bf16.mxu0 0
    %88 = vmatpush2.bf16.msra.mxu0 0
    %89 = vmatprep.subr.bf16.mxu0 0
    %90 = vmatpush2.bf16.msra.mxu0 0
    %91 = vmatprep.subr.bf16.mxu0 0
    %92 = vmatpush2.bf16.msra.mxu0 0
    %93 = vmatprep.subr.bf16.mxu0 0
    %94 = vmatpush2.bf16.msra.mxu0 0
    %95 = vmatprep.mubr.bf16.mxu0 0
    %96 = vmatmul.mubr.bf16.gmra.mxu0 %v61
    %v97 = vpop.f32.mrf.mxu0
    %v98 = vadd.f32 %v32, %v97
    %v99 = vpop.f32.mrf.mxu0
    %v100 = vadd.f32 %v36, %v99
    %v101 = vpop.f32.mrf.mxu0
    %v102 = vpop.f32.mrf.mxu0
    %103 = vdwg.mxu0
    %v104 = vmax.f32 %v98, 0.0
    %v105 = vmax.f32 %v100, 0.0
    %v106 = vpack.c.bf16 %v104, %v104
    %v107 = vpack.c.bf16 %v105, %v105
    %v108 = vld [vmem:[%s3] sm:$0xf]
    %v109 = vld [vmem:[%s3 + $0x4] sm:$0xf]
    %v110 = vld [vmem:[%s3 + $0x8] sm:$0xf]
    %v111 = vld [vmem:[%s3 + $0xc] sm:$0xf]
    %v112 = vld [vmem:[%s3 + $0x10] sm:$0xf]
    %v113 = vld [vmem:[%s3 + $0x14] sm:$0xf]
    %v114 = vld [vmem:[%s3 + $0x18] sm:$0xf]
    %v115 = vld [vmem:[%s3 + $0x1c] sm:$0xf]
    %v116 = vld [vmem:[%s3 + $0x20] sm:$0xf]
    %v117 = vld [vmem:[%s3 + $0x24] sm:$0xf]
    %v118 = vld [vmem:[%s3 + $0x28] sm:$0xf]
    %v119 = vld [vmem:[%s3 + $0x2c] sm:$0xf]
    %v120 = vld [vmem:[%s3 + $0x30] sm:$0xf]
    %v121 = vld [vmem:[%s3 + $0x34] sm:$0xf]
    %v122 = vld [vmem:[%s3 + $0x38] sm:$0xf]
    %v123 = vld [vmem:[%s3 + $0x3c] sm:$0xf]
    %v124 = vld [vmem:[%s3 + $0x40] sm:$0xf]
    %v125 = vld [vmem:[%s3 + $0x44] sm:$0xf]
    %v126 = vld [vmem:[%s3 + $0x48] sm:$0xf]
    %v127 = vld [vmem:[%s3 + $0x4c] sm:$0xf]
    %v128 = vld [vmem:[%s3 + $0x50] sm:$0xf]
    %v129 = vld [vmem:[%s3 + $0x54] sm:$0xf]
    %v130 = vld [vmem:[%s3 + $0x58] sm:$0xf]
    %v131 = vld [vmem:[%s3 + $0x5c] sm:$0xf]
    %v132 = vld [vmem:[%s3 + $0x60] sm:$0xf]
    %v133 = vld [vmem:[%s3 + $0x64] sm:$0xf]
    %v134 = vld [vmem:[%s3 + $0x68] sm:$0xf]
    %v135 = vld [vmem:[%s3 + $0x6c] sm:$0xf]
    %v136 = vld [vmem:[%s3 + $0x70] sm:$0xf]
    %v137 = vld [vmem:[%s3 + $0x74] sm:$0xf]
    %v138 = vld [vmem:[%s3 + $0x78] sm:$0xf]
    %v139 = vld [vmem:[%s3 + $0x7c] sm:$0xf]
    %v140 = vld [vmem:[%s4] sm:$0x1]
    %v142 = vlaneseq
    %v143 = vshrl.u32 %v142, 7
    %v144 = vsub.s32 0, %v143
    %v145 = vrot.slane %v140, %v144
    %v179 = vunpack.c.l.b16 %v108
    %v180 = vunpack.c.l.b16 %v109
    %v181 = vunpack.c.l.b16 %v110
    %v182 = vunpack.c.l.b16 %v111
    %v183 = vunpack.c.l.b16 %v112
    %v184 = vunpack.c.l.b16 %v113
    %v185 = vunpack.c.l.b16 %v114
    %v186 = vunpack.c.l.b16 %v115
    %v187 = vunpack.c.l.b16 %v116
    %v188 = vunpack.c.l.b16 %v117
    %v189 = vunpack.c.l.b16 %v118
    %v190 = vunpack.c.l.b16 %v119
    %v191 = vunpack.c.l.b16 %v120
    %v192 = vunpack.c.l.b16 %v121
    %v193 = vunpack.c.l.b16 %v122
    %v194 = vunpack.c.l.b16 %v123
    %v195 = vunpack.c.l.b16 %v124
    %v196 = vunpack.c.l.b16 %v125
    %v197 = vunpack.c.l.b16 %v126
    %v198 = vunpack.c.l.b16 %v127
    %v199 = vunpack.c.l.b16 %v128
    %v200 = vunpack.c.l.b16 %v129
    %v201 = vunpack.c.l.b16 %v130
    %v202 = vunpack.c.l.b16 %v131
    %v203 = vunpack.c.l.b16 %v132
    %v204 = vunpack.c.l.b16 %v133
    %v205 = vunpack.c.l.b16 %v134
    %v206 = vunpack.c.l.b16 %v135
    %v207 = vunpack.c.l.b16 %v136
    %v208 = vunpack.c.l.b16 %v137
    %v209 = vunpack.c.l.b16 %v138
    %v210 = vunpack.c.l.b16 %v139
    %v211 = vpack.c.b16 %v180, %v179
    %v212 = vpack.c.b16 %v182, %v181
    %v213 = vpack.c.b16 %v184, %v183
    %v214 = vpack.c.b16 %v186, %v185
    %v215 = vpack.c.b16 %v188, %v187
    %v216 = vpack.c.b16 %v190, %v189
    %v217 = vpack.c.b16 %v192, %v191
    %v218 = vpack.c.b16 %v194, %v193
    %v219 = vpack.c.b16 %v196, %v195
    %v220 = vpack.c.b16 %v198, %v197
    %v221 = vpack.c.b16 %v200, %v199
    %v222 = vpack.c.b16 %v202, %v201
    %v223 = vpack.c.b16 %v204, %v203
    %v224 = vpack.c.b16 %v206, %v205
    %v225 = vpack.c.b16 %v208, %v207
    %v226 = vpack.c.b16 %v210, %v209
    %243 = vmatprep.subr.bf16.mxu0 0
    %244 = vmatpush1.bf16.msra.mxu0 %v218
    %245 = vmatprep.subr.bf16.mxu0 0
    %246 = vmatpush1.bf16.msra.mxu0 %v217
    %247 = vmatprep.subr.bf16.mxu0 0
    %248 = vmatpush1.bf16.msra.mxu0 %v216
    %249 = vmatprep.subr.bf16.mxu0 0
    %250 = vmatpush1.bf16.msra.mxu0 %v215
    %251 = vmatprep.subr.bf16.mxu0 0
    %252 = vmatpush1.bf16.msra.mxu0 %v214
    %253 = vmatprep.subr.bf16.mxu0 0
    %254 = vmatpush1.bf16.msra.mxu0 %v213
    %255 = vmatprep.subr.bf16.mxu0 0
    %256 = vmatpush1.bf16.msra.mxu0 %v212
    %257 = vmatprep.subr.bf16.mxu0 0
    %258 = vmatpush1.bf16.msra.mxu0 %v211
    %259 = vmatprep.subr.bf16.mxu0 0
    %260 = vmatpush2.bf16.msra.mxu0 %v226
    %261 = vmatprep.subr.bf16.mxu0 0
    %262 = vmatpush2.bf16.msra.mxu0 %v225
    %263 = vmatprep.subr.bf16.mxu0 0
    %264 = vmatpush2.bf16.msra.mxu0 %v224
    %265 = vmatprep.subr.bf16.mxu0 0
    %266 = vmatpush2.bf16.msra.mxu0 %v223
    %267 = vmatprep.subr.bf16.mxu0 0
    %268 = vmatpush2.bf16.msra.mxu0 %v222
    %269 = vmatprep.subr.bf16.mxu0 0
    %270 = vmatpush2.bf16.msra.mxu0 %v221
    %271 = vmatprep.subr.bf16.mxu0 0
    %272 = vmatpush2.bf16.msra.mxu0 %v220
    %273 = vmatprep.subr.bf16.mxu0 0
    %274 = vmatpush2.bf16.msra.mxu0 %v219
    %275 = vmatprep.mubr.bf16.mxu0 %v107
    %276 = vmatmul.mubr.bf16.gmra.mxu0 %v106
    %v277 = vpop.f32.mrf.mxu0
    %v278 = vadd.f32 %v145, %v277
    %v279 = vpop.f32.mrf.mxu0
    %v280 = vpop.f32.mrf.mxu0
    %v281 = vpop.f32.mrf.mxu0
    %282 = vdwg.mxu0
    %vm283 = vcmask 72704
    %v284 = vsel %vm283, %v278, -inf
    %285 = vmax.xlane.f32.xlu0 %v284
    %v286 = vpop.xlane.xlu0 %285
    %v287 = vsub.f32 %v278, %v286
    %v288 = vmul.f32 %v287, 1.442695
    %v289 = vpow.pop %v288
    %v290 = vsel %vm283, %v289, 0.0
    %291 = vadd.xlane.f32.xlu0 %v290
    %v292 = vpop.xlane.xlu0 %291
    %v293 = vrcp.pop %v292
    %v294 = vmul.f32 %v289, %v293
    %295 = vst.msk [vmem:[#allocation2] sm:$0xff] %vm283, %v294
    // Predicated region
    $region22: #{policy_forward.1} parent=1 // pred_check
      _
    $region23: #{policy_forward.1} parent=1 // pred_check_branch
      %297 = sbr.rel (0) target = $region25
    $region24: #{policy_forward.1} parent=1 // pred_region
      %s299 = ssub.s32 128, 128
      %300 = vsyncadd [#allocation3], %s299
      %s302 = sshll.u32 [#allocation2], 4
      %s303 = int_to_ptr.vmem [resolvable:$true] %s302
      %305 = dma.vmem_to_hbm [thread:$0]  %s303, 128, %s5, [#allocation3]
    $region25: #{policy_forward.1} parent=1 // pred_fallthru
      _
    // Predicated region
    $region26: #{policy_forward.1} parent=1 // pred_check
      _
    $region27: #{policy_forward.1} parent=1 // pred_check_branch
      %307 = sbr.rel (0) target = $region29
    $region28: #{policy_forward.1} parent=1 // pred_region
      %308 = dma.done [#allocation3], 128
    $region29: #{policy_forward.1} parent=1 // pred_fallthru
      _
    %309 = vsyncpa [#allocation3], 1

</llo_original>
